<compile_context>
chip_gen: v5e
topology: v5e:2x2
jax: 0.10.0
libtpu: 0.0.40
codegen_flags: <defaults>
</compile_context>

<pallas_src>
import functools

import jax
import jax.numpy as jnp
from jax import lax
from jax.experimental import pallas as pl
from jax.experimental.pallas import tpu as pltpu


def _conv1d_kernel(pos_ref, x_ref, w_ref, b_ref, o_ref, *,
                   K, dilation, pad, L, lanes):
    """One grid step: one lane-dense (C_in, lanes) slab -> (C_out, lanes) output.

    pos_ref: (1, lanes) int32     position-within-sequence of every lane
    x_ref  : (C_in, lanes)        B_blk batch elements packed along lanes
    w_ref  : (K, C_out, C_in)     per-tap weights (compute dtype)
    b_ref  : (C_out, 1)           bias (f32)
    o_ref  : (C_out, lanes)       lane-dense output strip
    """
    x = x_ref[...]
    pos = pos_ref[...]
    acc = jnp.zeros(o_ref.shape, jnp.float32)
    for k in range(K):                      # K is small & static
        s = pad - k * dilation              # static shift for tap k
        xk = x
        if s % lanes != 0:
            # Circular shift on the XLU; lanes that wrapped across a batch
            # boundary are exactly the conv's zero-padding positions -> masked.
            xk = pltpu.roll(xk, s % lanes, axis=1)
        if s > 0:
            xk = jnp.where(pos >= s, xk, 0.0)
        elif s < 0:
            xk = jnp.where(pos < L + s, xk, 0.0)
        acc = acc + jnp.dot(w_ref[k], xk, preferred_element_type=jnp.float32)
    o_ref[...] = (acc + b_ref[...]).astype(o_ref.dtype)


def _vmem_limit_bytes():
    """Generation-aware VMEM limit (~96 MiB on v5e/v6e, ~48 MiB on v7x)."""
    try:
        cap = int(pltpu.get_tpu_info().vmem_capacity_bytes)
    except Exception:
        cap = 64 << 20              # conservative: v7x per-TC physical VMEM
    return min(cap * 3 // 4, 96 << 20)


def _pick_batch_block(N, L, C_in, C_out, in_item, out_item, vmem_budget):
    """Largest batch block whose lane width is 128-aligned and fits VMEM."""
    TARGET_LANES = 8192

    def footprint(b):
        lanes = b * L
        return ((2 * C_in * in_item                       # double-buffered input
                 + 2 * C_out * out_item                   # double-buffered output
                 + 2 * (C_in * in_item + C_out * 4))      # rolled slab + f32 acc temps
                * lanes)

    divs = [d for d in range(1, N + 1) if N % d == 0]
    dense = [d for d in divs if (d * L) % 128 == 0 or d == N]
    cands = dense if dense else divs
    best = cands[0]
    for d in cands:
        if d * L <= max(TARGET_LANES, L) and footprint(d) <= vmem_budget:
            best = max(best, d)
    # v7x megacore: prefer an even, >=2-step "parallel" batch grid when that
    # still leaves >=512 lanes of work per step.
    if N > 1 and N // best == 1:
        for d in sorted(cands, reverse=True):
            if d < best and d * L >= 512 and (N // d) % 2 == 0:
                best = d
                break
    return best


def conv1d_pallas(x, weight, bias, *, dilation=1, compute_dtype=jnp.bfloat16):
    """Conv1d matching nn.Conv1d(C_in, C_out, K, dilation=d, padding=d*(K-1)//2).

    x: (N, C_in, L), weight: (C_out, C_in, K), bias: (C_out,) -> (N, C_out, L).
    Operands are cast to `compute_dtype` (default bf16, f32 accumulation).
    """
    N, C_in, L = x.shape
    C_out, C_in_w, K = weight.shape
    assert C_in_w == C_in, "groups != 1 not supported"
    if (dilation * (K - 1)) % 2 != 0:
        # TODO(synk): even kernel_size with odd dilation changes PyTorch's output
        # length (L-1 instead of L); that case is not reproduced here.
        raise NotImplementedError("dilation*(kernel_size-1) must be even")
    pad = dilation * (K - 1) // 2

    cdt = jnp.dtype(compute_dtype) if compute_dtype is not None else x.dtype
    out_dt = x.dtype

    vmem_limit = _vmem_limit_bytes()
    B_blk = _pick_batch_block(N, L, C_in, C_out, jnp.dtype(cdt).itemsize,
                              jnp.dtype(out_dt).itemsize,
                              vmem_budget=vmem_limit * 3 // 5)
    n_blocks = N // B_blk
    lanes = B_blk * L

    # Layout plumbing (outside the kernel): lane-dense (C_in, N*L) input slab,
    # per-tap (K, C_out, C_in) weights, f32 bias column, per-lane position index.
    x_slab = jnp.transpose(x, (1, 0, 2)).reshape(C_in, N * L).astype(cdt)
    w_taps = jnp.transpose(weight, (2, 0, 1)).astype(cdt)      # (K, C_out, C_in)
    b_col = bias.astype(jnp.float32).reshape(C_out, 1)
    pos = jnp.tile(jnp.arange(L, dtype=jnp.int32), B_blk).reshape(1, lanes)

    kernel = functools.partial(_conv1d_kernel, K=K, dilation=dilation, pad=pad,
                               L=L, lanes=lanes)

    cost = pl.CostEstimate(
        flops=2 * N * L * C_out * C_in * K,
        transcendentals=0,
        bytes_accessed=(x_slab.size * x_slab.dtype.itemsize
                        + N * L * C_out * jnp.dtype(out_dt).itemsize
                        + w_taps.size * w_taps.dtype.itemsize
                        + b_col.size * 4 + pos.size * 4),
    )

    out_slab = pl.pallas_call(
        kernel,
        out_shape=jax.ShapeDtypeStruct((C_out, N * L), out_dt),
        grid=(n_blocks,),
        in_specs=[
            pl.BlockSpec((1, lanes), lambda n: (0, 0)),          # pos (constant)
            pl.BlockSpec((C_in, lanes), lambda n: (0, n)),       # input slab strip
            pl.BlockSpec((K, C_out, C_in), lambda n: (0, 0, 0)),  # weights (constant)
            pl.BlockSpec((C_out, 1), lambda n: (0, 0)),          # bias (constant)
        ],
        out_specs=pl.BlockSpec((C_out, lanes), lambda n: (0, n)),
        compiler_params=pltpu.CompilerParams(
            dimension_semantics=("parallel",),
            vmem_limit_bytes=vmem_limit,
        ),
        cost_estimate=cost,
    )(pos, x_slab, w_taps, b_col)

    # Unpack the lane-dense (C_out, N*L) slab back to NCL (layout plumbing only).
    return jnp.transpose(out_slab.reshape(C_out, N, L), (1, 0, 2))


def make_conv_params(key, in_channels, out_channels, kernel_size):
    """Deterministic weight_norm-style parameters: weight = g * v / ||v||_(dims 1,2)."""
    kv, kg, kb = jax.random.split(key, 3)
    v = jax.random.normal(kv, (out_channels, in_channels, kernel_size), jnp.float32)
    g = 1.0 + 0.1 * jax.random.normal(kg, (out_channels, 1, 1), jnp.float32)
    bias = 0.1 * jax.random.normal(kb, (out_channels,), jnp.float32)
    v_norm = jnp.sqrt(jnp.sum(v * v, axis=(1, 2), keepdims=True))
    weight = g * v / v_norm              # effective Conv1d weight (C_out, C_in, K)
    return weight, bias


if __name__ == "__main__":
    # Small shapes consistent with the module: batch=2, in_channels=4,
    # out_channels=8, seq length=16, kernel_size=3.
    N, C_in, C_out, L, K = 2, 4, 8, 16, 3

    key = jax.random.PRNGKey(0)
    kx, kp = jax.random.split(key)
    x = jax.random.normal(kx, (N, C_in, L), jnp.float32)
    weight, bias = make_conv_params(kp, C_in, C_out, K)

    for dilation in (1, 2):              # dilation=2 also exercises the halo masks
        pad = dilation * (K - 1) // 2
        ref = lax.conv_general_dilated(
            x, weight, window_strides=(1,), padding=[(pad, pad)],
            rhs_dilation=(dilation,), dimension_numbers=("NCH", "OIH", "NCH"),
        ) + bias[None, :, None]

        # f32 operands: tight check against the XLA reference.
        out_f32 = jax.block_until_ready(
            conv1d_pallas(x, weight, bias, dilation=dilation,
                          compute_dtype=jnp.float32))
        assert out_f32.shape == (N, C_out, L)
        assert jnp.allclose(out_f32, ref, atol=1e-5, rtol=1e-5)

        # Default bf16 operands (f32 accumulation): loose tolerance.
        out_bf16 = jax.block_until_ready(
            conv1d_pallas(x, weight, bias, dilation=dilation))
        assert out_bf16.shape == (N, C_out, L)
        assert jnp.allclose(out_bf16, ref, atol=5e-2, rtol=5e-2)

    print("KERNEL_OK")
</pallas_src>

<mosaic_0001>
module attributes {stable_mosaic.version = 11 : i64} {
  func.func @_conv1d_kernel(%arg0: i32, %arg1: memref<1x32xi32, #tpu.memory_space<vmem>>, %arg2: memref<4x32xf32, #tpu.memory_space<vmem>>, %arg3: memref<3x8x4xf32, #tpu.memory_space<vmem>>, %arg4: memref<8x1xf32, #tpu.memory_space<vmem>>, %arg5: memref<8x32xf32, #tpu.memory_space<vmem>>) attributes {dimension_semantics = [#tpu.dimension_semantics<parallel>], iteration_bounds = array<i64: 1>, scalar_prefetch = 0 : i64, scratch_operands = 0 : i64, tpu.core_type = #tpu.core_type<tc>, window_params = [{pipeline_mode = #tpu.pipeline_mode<synchronous>, transform_indices = @transform_0, window_bounds = array<i64: 1, 32>}, {transform_indices = @transform_1, window_bounds = array<i64: 4, 32>}, {pipeline_mode = #tpu.pipeline_mode<synchronous>, transform_indices = @transform_2, window_bounds = array<i64: 3, 8, 4>}, {pipeline_mode = #tpu.pipeline_mode<synchronous>, transform_indices = @transform_3, window_bounds = array<i64: 8, 1>}, {transform_indices = @transform_4, window_bounds = array<i64: 8, 32>}]} {
    %c0 = arith.constant 0 : index
    %c0_0 = arith.constant 0 : index
    %0 = vector.load %arg2[%c0, %c0_0] : memref<4x32xf32, #tpu.memory_space<vmem>>, vector<4x32xf32>
    %c0_1 = arith.constant 0 : index
    %c0_2 = arith.constant 0 : index
    %1 = vector.load %arg1[%c0_1, %c0_2] : memref<1x32xi32, #tpu.memory_space<vmem>>, vector<1x32xi32>
    %cst = arith.constant 0.000000e+00 : f32
    %2 = vector.broadcast %cst : f32 to vector<8x32xf32>
    %c1_i32 = arith.constant 1 : i32
    %3 = tpu.dynamic_rotate %0 by %c1_i32 dim 1 : vector<4x32xf32>, i32 -> vector<4x32xf32>
    %c1_i32_3 = arith.constant 1 : i32
    %4 = vector.broadcast %c1_i32_3 : i32 to vector<1x32xi32>
    %5 = arith.cmpi sge, %1, %4 : vector<1x32xi32>
    %cst_4 = arith.constant 0.000000e+00 : f32
    %6 = vector.shape_cast %5 : vector<1x32xi1> to vector<1x32xi1>
    %7 = vector.broadcast %6 : vector<1x32xi1> to vector<4x32xi1>
    %8 = vector.broadcast %cst_4 : f32 to vector<4x32xf32>
    %9 = arith.select %7, %3, %8 : vector<4x32xi1>, vector<4x32xf32>
    %c0_5 = arith.constant 0 : index
    %c0_6 = arith.constant 0 : index
    %c0_7 = arith.constant 0 : index
    %10 = vector.load %arg3[%c0_5, %c0_6, %c0_7] : memref<3x8x4xf32, #tpu.memory_space<vmem>>, vector<1x8x4xf32>
    %11 = vector.shape_cast %10 : vector<1x8x4xf32> to vector<8x4xf32>
    %cst_8 = arith.constant dense<0.000000e+00> : vector<8x32xf32>
    %12 = tpu.matmul %11, %9, %cst_8 {dimension_numbers = #tpu.dot_dimension_numbers<[1], [0], [0], [1], [0, 0, 1, 1], [], []>} : vector<8x4xf32>, vector<4x32xf32>, vector<8x32xf32> -> vector<8x32xf32>
    %13 = arith.addf %2, %12 : vector<8x32xf32>
    %c1 = arith.constant 1 : index
    %c0_9 = arith.constant 0 : index
    %c0_10 = arith.constant 0 : index
    %14 = vector.load %arg3[%c1, %c0_9, %c0_10] : memref<3x8x4xf32, #tpu.memory_space<vmem>>, vector<1x8x4xf32>
    %15 = vector.shape_cast %14 : vector<1x8x4xf32> to vector<8x4xf32>
    %cst_11 = arith.constant dense<0.000000e+00> : vector<8x32xf32>
    %16 = tpu.matmul %15, %0, %cst_11 {dimension_numbers = #tpu.dot_dimension_numbers<[1], [0], [0], [1], [0, 0, 1, 1], [], []>} : vector<8x4xf32>, vector<4x32xf32>, vector<8x32xf32> -> vector<8x32xf32>
    %17 = arith.addf %13, %16 : vector<8x32xf32>
    %c31_i32 = arith.constant 31 : i32
    %18 = tpu.dynamic_rotate %0 by %c31_i32 dim 1 : vector<4x32xf32>, i32 -> vector<4x32xf32>
    %c15_i32 = arith.constant 15 : i32
    %19 = vector.broadcast %c15_i32 : i32 to vector<1x32xi32>
    %20 = arith.cmpi slt, %1, %19 : vector<1x32xi32>
    %cst_12 = arith.constant 0.000000e+00 : f32
    %21 = vector.shape_cast %20 : vector<1x32xi1> to vector<1x32xi1>
    %22 = vector.broadcast %21 : vector<1x32xi1> to vector<4x32xi1>
    %23 = vector.broadcast %cst_12 : f32 to vector<4x32xf32>
    %24 = arith.select %22, %18, %23 : vector<4x32xi1>, vector<4x32xf32>
    %c2 = arith.constant 2 : index
    %c0_13 = arith.constant 0 : index
    %c0_14 = arith.constant 0 : index
    %25 = vector.load %arg3[%c2, %c0_13, %c0_14] : memref<3x8x4xf32, #tpu.memory_space<vmem>>, vector<1x8x4xf32>
    %26 = vector.shape_cast %25 : vector<1x8x4xf32> to vector<8x4xf32>
    %cst_15 = arith.constant dense<0.000000e+00> : vector<8x32xf32>
    %27 = tpu.matmul %26, %24, %cst_15 {dimension_numbers = #tpu.dot_dimension_numbers<[1], [0], [0], [1], [0, 0, 1, 1], [], []>} : vector<8x4xf32>, vector<4x32xf32>, vector<8x32xf32> -> vector<8x32xf32>
    %28 = arith.addf %17, %27 : vector<8x32xf32>
    %c0_16 = arith.constant 0 : index
    %c0_17 = arith.constant 0 : index
    %29 = vector.load %arg4[%c0_16, %c0_17] : memref<8x1xf32, #tpu.memory_space<vmem>>, vector<8x1xf32>
    %30 = vector.broadcast %29 : vector<8x1xf32> to vector<8x32xf32>
    %31 = arith.addf %28, %30 : vector<8x32xf32>
    %c0_18 = arith.constant 0 : index
    %c0_19 = arith.constant 0 : index
    %32 = vector.load %arg5[%c0_18, %c0_19] : memref<8x32xf32, #tpu.memory_space<vmem>>, vector<8x32xf32>
    tpu.vector_store %arg5[%c0_18, %c0_19], %31 {strides = array<i32>} : memref<8x32xf32, #tpu.memory_space<vmem>>, vector<8x32xf32>,
    return
  }
  func.func @transform_0(%arg0: i32) -> (i32, i32) {
    %c0_i32 = arith.constant 0 : i32
    %c0_i32_0 = arith.constant 0 : i32
    %c0_i32_1 = arith.constant 0 : i32
    return %c0_i32, %c0_i32_0 : i32, i32
  }
  func.func @transform_1(%arg0: i32) -> (i32, i32) {
    %c0_i32 = arith.constant 0 : i32
    %c0_i32_0 = arith.constant 0 : i32
    return %c0_i32, %arg0 : i32, i32
  }
  func.func @transform_2(%arg0: i32) -> (i32, i32, i32) {
    %c0_i32 = arith.constant 0 : i32
    %c0_i32_0 = arith.constant 0 : i32
    %c0_i32_1 = arith.constant 0 : i32
    %c0_i32_2 = arith.constant 0 : i32
    return %c0_i32, %c0_i32_0, %c0_i32_1 : i32, i32, i32
  }
  func.func @transform_3(%arg0: i32) -> (i32, i32) {
    %c0_i32 = arith.constant 0 : i32
    %c0_i32_0 = arith.constant 0 : i32
    %c0_i32_1 = arith.constant 0 : i32
    return %c0_i32, %c0_i32_0 : i32, i32
  }
  func.func @transform_4(%arg0: i32) -> (i32, i32) {
    %c0_i32 = arith.constant 0 : i32
    %c0_i32_0 = arith.constant 0 : i32
    return %c0_i32, %arg0 : i32, i32
  }
}

</mosaic_0001>

<llo_original>
// kernel: tpu_custom_call.1
$region0: #{tpu_custom_call.1}
  #allocation0 [shape = 'u32[]', space=smem, size = 0x4, offset = 0x4, fixed_abs, tag = 'smem constant byte address 0x4 - core index']
  #allocation1 [shape = 'u32[72,128]{1,0:T(1,128)}', space=vmem, size = 0x9000, scoped, tag = 'internal scratch']
  %s0 = inlined_call_operand.vmem [shape: s32[1,32], index: 0, kind: input, shape index: {}]
  %s1 = inlined_call_operand.vmem [shape: f32[4,32], index: 1, kind: input, shape index: {}]
  %s2 = inlined_call_operand.vmem [shape: f32[3,8,4], index: 2, kind: input, shape index: {}]
  %s3 = inlined_call_operand.vmem [shape: f32[8,1], index: 3, kind: input, shape index: {}]
  %s4 = inlined_call_operand.hbm [shape: f32[8,32], index: 4, kind: output, shape index: {}]
  %s5 = sld [smem:[#allocation0]]
  $region26: #{tpu_custom_call.1} parent=0
    _
  %s7 = ssub.s32 1, %s5
  %s8 = scalar_select 0, %s7, %s5
  $region1: #{tpu_custom_call.1} parent=0
    #allocation2 [shape = 'u8[4096]{0}', space=vmem, size = 0x1000, scoped, tag = 'output window, operand 0, single buffered']
    #allocation3 [shape = 's32[1]{0}', space=sflag, size = 0x4, scoped, tag = 'scoped memory for tpu_custom_call.1']
    %9 = vsyncpa [#allocation3], 0
    // Predicated region
    $region2: #{tpu_custom_call.1} parent=1 // pred_check
      _
    $region3: #{tpu_custom_call.1} parent=1 // pred_check_branch
      %11 = sbr.rel (0) target = $region5
    $region4: #{tpu_custom_call.1} parent=1 // pred_region
      _
    $region5: #{tpu_custom_call.1} parent=1 // pred_fallthru
      _
    // Predicated region
    $region6: #{tpu_custom_call.1} parent=1 // pred_check
      _
    $region7: #{tpu_custom_call.1} parent=1 // pred_check_branch
      %13 = sbr.rel (0) target = $region9
    $region8: #{tpu_custom_call.1} parent=1 // pred_region
      _
    $region9: #{tpu_custom_call.1} parent=1 // pred_fallthru
      _
    // Predicated region
    $region10: #{tpu_custom_call.1} parent=1 // pred_check
      _
    $region11: #{tpu_custom_call.1} parent=1 // pred_check_branch
      %15 = sbr.rel (0) target = $region13
    $region12: #{tpu_custom_call.1} parent=1 // pred_region
      _
    $region13: #{tpu_custom_call.1} parent=1 // pred_fallthru
      _
    // Predicated region
    $region14: #{tpu_custom_call.1} parent=1 // pred_check
      _
    $region15: #{tpu_custom_call.1} parent=1 // pred_check_branch
      %17 = sbr.rel (0) target = $region17
    $region16: #{tpu_custom_call.1} parent=1 // pred_region
      _
    $region17: #{tpu_custom_call.1} parent=1 // pred_fallthru
      _
    %v18 = vld [vmem:[%s1] sm:$0xf]
    %v19 = vld [vmem:[%s0] sm:$0x1]
    %vm20 = vcmask 1047808
    %21 = vrot.lane.b32.xlu0 %v18, 32
    %v22 = vpop.permute.xlu0 %21
    %v23 = vsel %vm20, %v22, %v18
    %24 = vrot.lane.b32.xlu0 %v23, 32
    %v25 = vpop.permute.xlu0 %24
    %v26 = vsel %vm20, %v25, %v18
    %vm27 = vcmp.ge.s32.totalorder %v19, 1
    %v28 = vsel %vm27, 1, 0
    %v29 = vperm.slane %v28, 0
    %vm30 = vcmp.eq.s32.totalorder %v29, 1
    %32 = vrot.lane.b32.xlu0 %v26, 97
    %v33 = vpop.permute.xlu0 %32
    %v35 = vsel %vm30, %v33, 0.0
    %v36 = vld [vmem:[%s2] sm:$0xff]
    %s37 = scalar_lea.vmem %s2, 8
    %v38 = vld [vmem:[%s37] sm:$0xff]
    %vm39 = vcmask 31744
    %v41 = vsel %vm39, %v38, 0
    %vm43 = vcmask 1043456
    %v45 = vsel %vm43, %v18, 0
    %47 = vmatpush.msra.mxu0 0.0
    %48 = vmatpush.msra.mxu0 0.0
    %49 = vmatpush.msra.mxu0 0.0
    %50 = vmatpush.msra.mxu0 0.0
    %51 = vmatpush.msra.mxu0 0.0
    %52 = vmatpush.msra.mxu0 0.0
    %53 = vmatpush.msra.mxu0 0.0
    %54 = vmatpush.msra.mxu0 0.0
    %55 = vmatpush.msra.mxu0 0.0
    %56 = vmatpush.msra.mxu0 0.0
    %57 = vmatpush.msra.mxu0 0.0
    %58 = vmatpush.msra.mxu0 0.0
    %59 = vmatpush.msra.mxu0 0.0
    %60 = vmatpush.msra.mxu0 0.0
    %61 = vmatpush.msra.mxu0 0.0
    %62 = vmatpush.msra.mxu0 %v45
    %63 = vmatmul.f32.gmra.mxu0 %v41
    %v64 = vpop.f32.mrf.mxu0
    %v65 = vadd.f32 0.0, %v64
    %66 = vdwg.mxu0
    %v68 = vsel %vm39, %v36, 0
    %v71 = vsel %vm43, %v35, 0
    %73 = vmatpush.msra.mxu0 0.0
    %74 = vmatpush.msra.mxu0 0.0
    %75 = vmatpush.msra.mxu0 0.0
    %76 = vmatpush.msra.mxu0 0.0
    %77 = vmatpush.msra.mxu0 0.0
    %78 = vmatpush.msra.mxu0 0.0
    %79 = vmatpush.msra.mxu0 0.0
    %80 = vmatpush.msra.mxu0 0.0
    %81 = vmatpush.msra.mxu0 0.0
    %82 = vmatpush.msra.mxu0 0.0
    %83 = vmatpush.msra.mxu0 0.0
    %84 = vmatpush.msra.mxu0 0.0
    %85 = vmatpush.msra.mxu0 0.0
    %86 = vmatpush.msra.mxu0 0.0
    %87 = vmatpush.msra.mxu0 0.0
    %88 = vmatpush.msra.mxu0 %v71
    %89 = vmatmul.f32.gmra.mxu0 %v68
    %v90 = vpop.f32.mrf.mxu0
    %v91 = vadd.f32 %v65, %v90
    %92 = vdwg.mxu0
    %vm93 = vcmp.lt.s32.totalorder %v19, 15
    %v94 = vsel %vm93, 1, 0
    %v95 = vperm.slane %v94, 0
    %vm96 = vcmp.eq.s32.totalorder %v95, 1
    %97 = vrot.lane.b32.xlu0 %v26, 127
    %v98 = vpop.permute.xlu0 %97
    %v100 = vsel %vm96, %v98, 0.0
    %s101 = scalar_lea.vmem %s2, 16
    %v102 = vld [vmem:[%s101] sm:$0xff]
    %v104 = vsel %vm39, %v102, 0
    %v107 = vsel %vm43, %v100, 0
    %109 = vmatpush.msra.mxu0 0.0
    %110 = vmatpush.msra.mxu0 0.0
    %111 = vmatpush.msra.mxu0 0.0
    %112 = vmatpush.msra.mxu0 0.0
    %113 = vmatpush.msra.mxu0 0.0
    %114 = vmatpush.msra.mxu0 0.0
    %115 = vmatpush.msra.mxu0 0.0
    %116 = vmatpush.msra.mxu0 0.0
    %117 = vmatpush.msra.mxu0 0.0
    %118 = vmatpush.msra.mxu0 0.0
    %119 = vmatpush.msra.mxu0 0.0
    %120 = vmatpush.msra.mxu0 0.0
    %121 = vmatpush.msra.mxu0 0.0
    %122 = vmatpush.msra.mxu0 0.0
    %123 = vmatpush.msra.mxu0 0.0
    %124 = vmatpush.msra.mxu0 %v107
    %125 = vmatmul.f32.gmra.mxu0 %v104
    %v126 = vpop.f32.mrf.mxu0
    %v127 = vadd.f32 0.0, %v126
    %128 = vdwg.mxu0
    %v129 = vadd.f32 %v91, %v127
    %v130 = vld [vmem:[%s3] sm:$0xff]
    %132 = vset.pattern.permute.xlu0 0
    %133 = vperm.xlu0 %132, %v130
    %v134 = vpop.permute.xlu0 %133
    %v136 = vadd.f32 %v129, %v134
    %vm137 = vcmask 261120
    %138 = vst.msk [vmem:[#allocation2] sm:$0xff] %vm137, %v136
    // Predicated region
    $region18: #{tpu_custom_call.1} parent=1 // pred_check
      _
    $region19: #{tpu_custom_call.1} parent=1 // pred_check_branch
      %140 = sbr.rel (0) target = $region21
    $region20: #{tpu_custom_call.1} parent=1 // pred_region
      %142 = vsyncadd [#allocation3], 0
      %s144 = sshll.u32 [#allocation2], 4
      %s145 = int_to_ptr.vmem [resolvable:$true] %s144
      %s146 = sshll.u32 %s4, 4
      %s147 = int_to_ptr.hbm [resolvable:$true] %s146
      %149 = dma.vmem_to_hbm [thread:$0]  %s145, 128, %s147, [#allocation3]
    $region21: #{tpu_custom_call.1} parent=1 // pred_fallthru
      _
    // Predicated region
    $region22: #{tpu_custom_call.1} parent=1 // pred_check
      _
    $region23: #{tpu_custom_call.1} parent=1 // pred_check_branch
      %151 = sbr.rel (0) target = $region25
    $region24: #{tpu_custom_call.1} parent=1 // pred_region
      %153 = dma.done [#allocation3], 128
    $region25: #{tpu_custom_call.1} parent=1 // pred_fallthru
      _
    %154 = vsyncpa [#allocation3], 1

</llo_original>
